<compile_context>
chip_gen: v5e
topology: v5e:2x2
jax: 0.10.0
libtpu: 0.0.40
codegen_flags: <defaults>
</compile_context>

<pallas_src>
import jax
import jax.numpy as jnp
from jax.experimental import pallas as pl
from jax.experimental.pallas import tpu as pltpu


def _round_up(x, m):
    return (x + m - 1) // m * m


def _logreg_kernel(x_ref, w_ref, b_ref, o_ref):
    # MXU matmul with f32 accumulation; bias add (VPU) + sigmoid (EUP) on the
    # f32 accumulator; single store in the output dtype.
    logits = jnp.dot(x_ref[...], w_ref[...], preferred_element_type=jnp.float32)
    logits = logits + b_ref[...]  # bias is kept in f32
    o_ref[...] = jax.nn.sigmoid(logits).astype(o_ref.dtype)


def prepare_params(w_pt, b_pt, param_dtype=None):
    """One-time (init-time) parameter prep, hoisted out of the per-call path.

    w_pt: [D_out, D_in] (PyTorch nn.Linear layout) -> w_t [D_in, D_out]
    b_pt: [D_out]                                  -> b_2d [1, D_out] float32
    """
    if param_dtype is None:
        param_dtype = w_pt.dtype
    w_t = jnp.asarray(w_pt.T, dtype=param_dtype)
    b_2d = jnp.asarray(b_pt, dtype=jnp.float32).reshape(1, -1)
    return w_t, b_2d


def logistic_regression_fwd(x, w_t, b_2d, *, block_rows=1024, out_dtype=None):
    """sigmoid(x @ w_t + b).  x: [B, D_in], w_t: [D_in, D_out], b_2d: [1, D_out]."""
    B, D_in = x.shape
    D_in_w, D_out = w_t.shape
    assert D_in_w == D_in and b_2d.shape == (1, D_out)
    if out_dtype is None:
        out_dtype = x.dtype

    # Sublane alignment of the batch tile (f32: 8, bf16: 16, int8: 32).
    align = max(8, 32 // jnp.dtype(x.dtype).itemsize)

    # Balanced batch tiles, no HBM-side row padding. Force >= 2 tiles when the
    # batch allows it so dimension_semantics=("parallel",) can use both v7x TCs.
    num_tiles = max(pl.cdiv(B, block_rows), min(2, pl.cdiv(B, align)))
    TB = _round_up(pl.cdiv(B, num_tiles), align)
    grid = (pl.cdiv(B, TB),)

    # VMEM budget: double-buffered x / out tiles + resident W + bias, with the
    # VMEM-internal lane padding to 128 accounted for; capped for v7x (64 MiB).
    x_bytes = _round_up(TB, align) * _round_up(D_in, 128) * x.dtype.itemsize
    o_bytes = _round_up(TB, align) * _round_up(D_out, 128) * jnp.dtype(out_dtype).itemsize
    w_bytes = _round_up(D_in, 8) * _round_up(D_out, 128) * w_t.dtype.itemsize
    b_bytes = 8 * _round_up(D_out, 128) * 4
    working_set = 2 * (x_bytes + o_bytes + w_bytes + b_bytes)
    vmem_limit = int(min(working_set + (4 << 20), 48 << 20))

    return pl.pallas_call(
        _logreg_kernel,
        out_shape=jax.ShapeDtypeStruct((B, D_out), out_dtype),
        grid_spec=pltpu.PrefetchScalarGridSpec(
            num_scalar_prefetch=0,
            grid=grid,
            in_specs=[
                pl.BlockSpec((TB, D_in), lambda i: (i, 0)),      # streamed x tiles
                pl.BlockSpec((D_in, D_out), lambda i: (0, 0)),   # resident W
                pl.BlockSpec((1, D_out), lambda i: (0, 0)),      # resident bias
            ],
            out_specs=pl.BlockSpec((TB, D_out), lambda i: (i, 0)),
        ),
        compiler_params=pltpu.CompilerParams(
            dimension_semantics=("parallel",),
            vmem_limit_bytes=vmem_limit,
        ),
    )(x, w_t, b_2d)


def logistic_regression(x, w_pt, b_pt, **kwargs):
    """Convenience wrapper (PyTorch-layout params). Prefer prepare_params() once
    at init + logistic_regression_fwd() per call in real use."""
    w_t, b_2d = prepare_params(w_pt, b_pt)
    return logistic_regression_fwd(x, w_t, b_2d, **kwargs)


if __name__ == "__main__":
    # Small shapes consistent with nn.Linear(input_size, output_size) + Sigmoid.
    batch, input_size, output_size = 8, 32, 16

    key = jax.random.PRNGKey(0)
    kx, kw, kb = jax.random.split(key, 3)

    x = jax.random.normal(kx, (batch, input_size), dtype=jnp.float32)
    bound = 1.0 / jnp.sqrt(input_size)
    w_pt = jax.random.uniform(kw, (output_size, input_size), jnp.float32,
                              minval=-bound, maxval=bound)
    b_pt = jax.random.uniform(kb, (output_size,), jnp.float32,
                              minval=-bound, maxval=bound)

    # Parameter prep done once (hoisted out of the per-call path).
    w_t, b_2d = prepare_params(w_pt, b_pt)

    out = jax.block_until_ready(logistic_regression_fwd(x, w_t, b_2d))
    ref = jax.nn.sigmoid(x @ w_pt.T + b_pt)
    assert out.shape == (batch, output_size)
    assert jnp.allclose(out, ref, atol=1e-5, rtol=1e-5)

    # Larger batch, not a tile multiple: exercises the multi-tile grid and the
    # ragged (masked) boundary tile with zero HBM-side padding.
    batch2 = 1037
    x2 = jax.random.normal(jax.random.fold_in(kx, 1), (batch2, input_size),
                           dtype=jnp.float32)
    out2 = jax.block_until_ready(logistic_regression_fwd(x2, w_t, b_2d))
    ref2 = jax.nn.sigmoid(x2 @ w_pt.T + b_pt)
    assert out2.shape == (batch2, output_size)
    assert jnp.allclose(out2, ref2, atol=1e-5, rtol=1e-5)

    # bf16 weights/activations path (halves HBM read traffic on v6e/v7x);
    # accumulation stays f32 inside the kernel, tolerance relaxed for bf16.
    batch3 = 128
    x3 = jax.random.normal(jax.random.fold_in(kx, 2), (batch3, input_size),
                           dtype=jnp.float32).astype(jnp.bfloat16)
    w_bf, b_bf2d = prepare_params(w_pt, b_pt, param_dtype=jnp.bfloat16)
    out3 = jax.block_until_ready(
        logistic_regression_fwd(x3, w_bf, b_bf2d, out_dtype=jnp.float32))
    ref3 = jax.nn.sigmoid(
        x3.astype(jnp.float32) @ w_bf.astype(jnp.float32) + b_pt)
    assert out3.shape == (batch3, output_size)
    assert jnp.allclose(out3, ref3, atol=2e-2, rtol=0)

    print("KERNEL_OK")
</pallas_src>

<mosaic_0001>
module attributes {stable_mosaic.version = 11 : i64} {
  func.func @_logreg_kernel(%arg0: i32, %arg1: memref<8x32xf32, #tpu.memory_space<vmem>>, %arg2: memref<32x16xf32, #tpu.memory_space<vmem>>, %arg3: memref<1x16xf32, #tpu.memory_space<vmem>>, %arg4: memref<8x16xf32, #tpu.memory_space<vmem>>) attributes {dimension_semantics = [#tpu.dimension_semantics<parallel>], iteration_bounds = array<i64: 1>, scalar_prefetch = 0 : i64, scratch_operands = 0 : i64, tpu.core_type = #tpu.core_type<tc>, window_params = [{transform_indices = @transform_0, window_bounds = array<i64: 8, 32>}, {pipeline_mode = #tpu.pipeline_mode<synchronous>, transform_indices = @transform_1, window_bounds = array<i64: 32, 16>}, {pipeline_mode = #tpu.pipeline_mode<synchronous>, transform_indices = @transform_2, window_bounds = array<i64: 1, 16>}, {transform_indices = @transform_3, window_bounds = array<i64: 8, 16>}]} {
    %c0 = arith.constant 0 : index
    %c0_0 = arith.constant 0 : index
    %0 = vector.load %arg1[%c0, %c0_0] : memref<8x32xf32, #tpu.memory_space<vmem>>, vector<8x32xf32>
    %c0_1 = arith.constant 0 : index
    %c0_2 = arith.constant 0 : index
    %1 = vector.load %arg2[%c0_1, %c0_2] : memref<32x16xf32, #tpu.memory_space<vmem>>, vector<32x16xf32>
    %cst = arith.constant dense<0.000000e+00> : vector<8x16xf32>
    %2 = tpu.matmul %0, %1, %cst {dimension_numbers = #tpu.dot_dimension_numbers<[1], [0], [0], [1], [0, 0, 1, 1], [], []>} : vector<8x32xf32>, vector<32x16xf32>, vector<8x16xf32> -> vector<8x16xf32>
    %c0_3 = arith.constant 0 : index
    %c0_4 = arith.constant 0 : index
    %3 = vector.load %arg3[%c0_3, %c0_4] : memref<1x16xf32, #tpu.memory_space<vmem>>, vector<1x16xf32>
    %4 = vector.broadcast %3 : vector<1x16xf32> to vector<8x16xf32>
    %5 = arith.addf %2, %4 : vector<8x16xf32>
    %6 = arith.negf %5 : vector<8x16xf32>
    %7 = math.exp %6 : vector<8x16xf32>
    %cst_5 = arith.constant 1.000000e+00 : f32
    %8 = vector.broadcast %cst_5 : f32 to vector<8x16xf32>
    %9 = arith.addf %8, %7 : vector<8x16xf32>
    %10 = arith.divf %8, %9 : vector<8x16xf32>
    %c0_6 = arith.constant 0 : index
    %c0_7 = arith.constant 0 : index
    %11 = vector.load %arg4[%c0_6, %c0_7] : memref<8x16xf32, #tpu.memory_space<vmem>>, vector<8x16xf32>
    tpu.vector_store %arg4[%c0_6, %c0_7], %10 {strides = array<i32>} : memref<8x16xf32, #tpu.memory_space<vmem>>, vector<8x16xf32>,
    return
  }
  func.func @transform_0(%arg0: i32) -> (i32, i32) {
    %c0_i32 = arith.constant 0 : i32
    %c0_i32_0 = arith.constant 0 : i32
    return %arg0, %c0_i32 : i32, i32
  }
  func.func @transform_1(%arg0: i32) -> (i32, i32) {
    %c0_i32 = arith.constant 0 : i32
    %c0_i32_0 = arith.constant 0 : i32
    %c0_i32_1 = arith.constant 0 : i32
    return %c0_i32, %c0_i32_0 : i32, i32
  }
  func.func @transform_2(%arg0: i32) -> (i32, i32) {
    %c0_i32 = arith.constant 0 : i32
    %c0_i32_0 = arith.constant 0 : i32
    %c0_i32_1 = arith.constant 0 : i32
    return %c0_i32, %c0_i32_0 : i32, i32
  }
  func.func @transform_3(%arg0: i32) -> (i32, i32) {
    %c0_i32 = arith.constant 0 : i32
    %c0_i32_0 = arith.constant 0 : i32
    return %arg0, %c0_i32 : i32, i32
  }
}

</mosaic_0001>

<llo_original>
// kernel: tpu_custom_call.1
$region0: #{tpu_custom_call.1}
  #allocation0 [shape = 'u32[]', space=smem, size = 0x4, offset = 0x4, fixed_abs, tag = 'smem constant byte address 0x4 - core index']
  #allocation1 [shape = 'u32[72,128]{1,0:T(1,128)}', space=vmem, size = 0x9000, scoped, tag = 'internal scratch']
  %s0 = inlined_call_operand.vmem [shape: f32[8,32], index: 0, kind: input, shape index: {}]
  %s1 = inlined_call_operand.vmem [shape: f32[32,16], index: 1, kind: input, shape index: {}]
  %s2 = inlined_call_operand.vmem [shape: f32[1,16], index: 2, kind: input, shape index: {}]
  %s3 = inlined_call_operand.hbm [shape: f32[8,16], index: 3, kind: output, shape index: {}]
  %s4 = sld [smem:[#allocation0]]
  $region22: #{tpu_custom_call.1} parent=0
    _
  %s6 = ssub.s32 1, %s4
  %s7 = scalar_select 0, %s6, %s4
  $region1: #{tpu_custom_call.1} parent=0
    #allocation2 [shape = 'u8[4096]{0}', space=vmem, size = 0x1000, scoped, tag = 'output window, operand 0, single buffered']
    #allocation3 [shape = 's32[1]{0}', space=sflag, size = 0x4, scoped, tag = 'scoped memory for tpu_custom_call.1']
    %8 = vsyncpa [#allocation3], 0
    // Predicated region
    $region2: #{tpu_custom_call.1} parent=1 // pred_check
      _
    $region3: #{tpu_custom_call.1} parent=1 // pred_check_branch
      %10 = sbr.rel (0) target = $region5
    $region4: #{tpu_custom_call.1} parent=1 // pred_region
      _
    $region5: #{tpu_custom_call.1} parent=1 // pred_fallthru
      _
    // Predicated region
    $region6: #{tpu_custom_call.1} parent=1 // pred_check
      _
    $region7: #{tpu_custom_call.1} parent=1 // pred_check_branch
      %12 = sbr.rel (0) target = $region9
    $region8: #{tpu_custom_call.1} parent=1 // pred_region
      _
    $region9: #{tpu_custom_call.1} parent=1 // pred_fallthru
      _
    // Predicated region
    $region10: #{tpu_custom_call.1} parent=1 // pred_check
      _
    $region11: #{tpu_custom_call.1} parent=1 // pred_check_branch
      %14 = sbr.rel (0) target = $region13
    $region12: #{tpu_custom_call.1} parent=1 // pred_region
      _
    $region13: #{tpu_custom_call.1} parent=1 // pred_fallthru
      _
    %v15 = vld [vmem:[%s0] sm:$0xff]
    %v16 = vld [vmem:[%s1] sm:$0xff]
    %v17 = vld [vmem:[%s1 + $0x8] sm:$0xff]
    %v18 = vld [vmem:[%s1 + $0x10] sm:$0xff]
    %v19 = vld [vmem:[%s1 + $0x18] sm:$0xff]
    %v20 = vld [vmem:[%s2] sm:$0x1]
    %v22 = vperm.slane %v20, 0
    %vm24 = vcmask 261120
    %v26 = vsel %vm24, %v15, 0
    %28 = vmatpush.msra.mxu0 0.0
    %29 = vmatpush.msra.mxu0 0.0
    %30 = vmatpush.msra.mxu0 0.0
    %31 = vmatpush.msra.mxu0 0.0
    %32 = vmatpush.msra.mxu0 0.0
    %33 = vmatpush.msra.mxu0 0.0
    %34 = vmatpush.msra.mxu0 0.0
    %35 = vmatpush.msra.mxu0 0.0
    %36 = vmatpush.msra.mxu0 0.0
    %37 = vmatpush.msra.mxu0 0.0
    %38 = vmatpush.msra.mxu0 0.0
    %39 = vmatpush.msra.mxu0 0.0
    %40 = vmatpush.msra.mxu0 %v19
    %41 = vmatpush.msra.mxu0 %v18
    %42 = vmatpush.msra.mxu0 %v17
    %43 = vmatpush.msra.mxu0 %v16
    %44 = vmatmul.f32.gmra.mxu0 %v26
    %v45 = vpop.f32.mrf.mxu0
    %v46 = vadd.f32 %v22, %v45
    %47 = vdwg.mxu0
    %v48 = vxor.u32 %v46, 2147483648
    %v49 = vmul.f32 %v48, 1.442695
    %v50 = vpow.pop %v49
    %v51 = vadd.f32 %v50, 1.0
    %v52 = vrcp.pop %v51
    %v53 = vmul.f32 %v51, %v52
    %v54 = vsub.f32 1.0, %v53
    %v55 = vmul.f32 %v52, %v54
    %v56 = vadd.f32 %v52, %v55
    %vm57 = vweird.f32 %v51
    %vm58 = vweird.f32 %v52
    %vm59 = vmor %vm57, %vm58
    %v60 = vsel %vm59, %v52, %v56
    %v61 = vand.u32 2147483647, %v51
    %vm62 = vcmp.eq.f32.partialorder %v61, 8.507059e+37
    %v63 = vand.u32 %v51, 2147483648
    %v64 = vor.u32 1.1754944e-38, %v63
    %v65 = vsel %vm62, %v64, %v60
    %v66 = vmul.f32 1.0, %v65
    %vm67 = vcmask 130048
    %68 = vst.msk [vmem:[#allocation2] sm:$0xff] %vm67, %v66
    // Predicated region
    $region14: #{tpu_custom_call.1} parent=1 // pred_check
      _
    $region15: #{tpu_custom_call.1} parent=1 // pred_check_branch
      %70 = sbr.rel (0) target = $region17
    $region16: #{tpu_custom_call.1} parent=1 // pred_region
      %72 = vsyncadd [#allocation3], 0
      %s74 = sshll.u32 [#allocation2], 4
      %s75 = int_to_ptr.vmem [resolvable:$true] %s74
      %s76 = sshll.u32 %s3, 4
      %s77 = int_to_ptr.hbm [resolvable:$true] %s76
      %79 = dma.vmem_to_hbm [thread:$0]  %s75, 128, %s77, [#allocation3]
    $region17: #{tpu_custom_call.1} parent=1 // pred_fallthru
      _
    // Predicated region
    $region18: #{tpu_custom_call.1} parent=1 // pred_check
      _
    $region19: #{tpu_custom_call.1} parent=1 // pred_check_branch
      %81 = sbr.rel (0) target = $region21
    $region20: #{tpu_custom_call.1} parent=1 // pred_region
      %83 = dma.done [#allocation3], 128
    $region21: #{tpu_custom_call.1} parent=1 // pred_fallthru
      _
    %84 = vsyncpa [#allocation3], 1

</llo_original>
